<compile_context>
chip_gen: v7x
topology: tpu7x:2x2x1
jax: 0.10.0
libtpu: 0.0.40
codegen_flags: <defaults>
</compile_context>

<pallas_src>
import jax
import jax.numpy as jnp
from jax.experimental import pallas as pl
from jax.experimental.pallas import tpu as pltpu


def _glm_mlp_kernel(x_ref, wg_ref, wu_ref, wd_ref, o_ref, acc_ref):
    """One (token-tile i, ffn-tile j) step of the fused GLM MLP.

    x_ref   : (tm, H)  token tile (resident across the j axis)
    wg_ref  : (H, tf)  gate columns  [j*tf : (j+1)*tf]        of w_gate_up
    wu_ref  : (H, tf)  up   columns  [F + j*tf : F + (j+1)*tf] of w_gate_up
    wd_ref  : (tf, H)  rows [j*tf : (j+1)*tf] of w_down
    o_ref   : (tm, H)  output tile (written on the last j step)
    acc_ref : (tm, H)  f32 accumulator scratch (persists across j)
    """
    j = pl.program_id(1)

    @pl.when(j == 0)
    def _():
        acc_ref[...] = jnp.zeros_like(acc_ref)

    x = x_ref[...]
    # Two small [tm, tf] intermediates instead of one [tm, 2F] + lane-axis slice.
    gate = jnp.dot(x, wg_ref[...], preferred_element_type=jnp.float32)
    up = jnp.dot(x, wu_ref[...], preferred_element_type=jnp.float32)

    # SiluAndMul in f32: silu(gate) * up  (logistic goes to the EUP slot).
    act = (gate * jax.lax.logistic(gate)) * up

    # Partial down-projection for this FFN tile, f32-accumulated.
    acc_ref[...] += jnp.dot(act.astype(wd_ref.dtype), wd_ref[...],
                            preferred_element_type=jnp.float32)

    @pl.when(j == pl.num_programs(1) - 1)
    def _():
        o_ref[...] = acc_ref[...].astype(o_ref.dtype)


def glm_mlp(x, w_gate_up, w_down, *, tm=None, tf=None, vmem_limit_bytes=None):
    """Fused GLM MLP: SiluAndMul(x @ w_gate_up) @ w_down (no bias)."""
    T, H = x.shape
    H2, two_f = w_gate_up.shape
    F, H3 = w_down.shape
    assert H == H2 and H == H3 and two_f == 2 * F

    x_bytes = jnp.dtype(x.dtype).itemsize
    w_bytes = jnp.dtype(w_gate_up.dtype).itemsize
    sublane = 8 if x_bytes >= 4 else (16 if x_bytes == 2 else 32)

    # ---- token tile: multiple of the sublane count, capped at 256 (MXU row dim).
    if tm is None:
        t_round = max(sublane, ((T + sublane - 1) // sublane) * sublane)
        tm = min(256, t_round)
    T_pad = ((T + tm - 1) // tm) * tm

    # ---- FFN tile: largest MXU-friendly divisor of F that fits the VMEM budget.
    vmem_budget = 40 * 1024 * 1024  # conservative (v7x has only 64 MiB physical)

    def _step_bytes(tf_):
        # double-buffered weight blocks (gate + up + down) + x/out tiles + f32 acc
        return (2 * (2 * H * tf_ * w_bytes + tf_ * H * w_bytes)
                + 2 * tm * H * x_bytes + 2 * tm * H * x_bytes + tm * H * 4)

    if tf is None:
        tf = F
        for cand in (2048, 1024, 512, 256, 128):
            if F % cand == 0:
                tf = cand
                break
        while tf > 128 and F % (tf // 2) == 0 and _step_bytes(tf) > vmem_budget:
            tf //= 2
    assert F % tf == 0, "tf must divide ffn_hidden_size"
    nfb = F // tf  # block offset of the 'up' half inside w_gate_up

    if vmem_limit_bytes is None:
        vmem_limit_bytes = 48 * 1024 * 1024

    # ---- pad token dim so the grid is exact (padded rows are zeros -> output 0,
    #      sliced off below).
    x_in = x if T_pad == T else jnp.pad(x, ((0, T_pad - T), (0, 0)))

    cost = pl.CostEstimate(
        flops=6 * T * H * F,                     # 2*T*H*2F + 2*T*F*H
        transcendentals=T * F,                   # one logistic per gate element
        bytes_accessed=(2 * T * H * x_bytes      # x in, out
                        + H * two_f * w_bytes    # gate/up weights
                        + F * H * w_bytes),      # down weights
    )

    out = pl.pallas_call(
        _glm_mlp_kernel,
        out_shape=jax.ShapeDtypeStruct((T_pad, H), x.dtype),
        grid_spec=pltpu.PrefetchScalarGridSpec(
            num_scalar_prefetch=0,
            grid=(T_pad // tm, F // tf),
            in_specs=[
                pl.BlockSpec((tm, H), lambda i, j: (i, 0)),             # x tile
                pl.BlockSpec((H, tf), lambda i, j: (0, j)),             # gate cols
                pl.BlockSpec((H, tf), lambda i, j, n=nfb: (0, j + n)),  # up cols
                pl.BlockSpec((tf, H), lambda i, j: (j, 0)),             # down rows
            ],
            out_specs=pl.BlockSpec((tm, H), lambda i, j: (i, 0)),
            scratch_shapes=[pltpu.VMEM((tm, H), jnp.float32)],
        ),
        compiler_params=pltpu.CompilerParams(
            dimension_semantics=("parallel", "arbitrary"),
            vmem_limit_bytes=vmem_limit_bytes,
        ),
        cost_estimate=cost,
    )(x_in, w_gate_up, w_gate_up, w_down)

    return out if T_pad == T else out[:T]


def glm_mlp_ref(x, w_gate_up, w_down):
    inter = x @ w_gate_up
    f = w_down.shape[0]
    gate, up = inter[:, :f], inter[:, f:]
    return (jax.nn.silu(gate) * up) @ w_down


if __name__ == "__main__":
    # Small, deterministic problem consistent with GLMMLP.forward, sized so the
    # tiled structure (2 token tiles x 2 FFN tiles) and lane/sublane alignment
    # are actually exercised.
    T, H, F = 16, 128, 256

    key = jax.random.PRNGKey(0)
    kx, k1, k2 = jax.random.split(key, 3)
    x = jax.random.normal(kx, (T, H), dtype=jnp.float32)
    w_gate_up = jax.random.normal(k1, (H, 2 * F), dtype=jnp.float32) * 0.05
    w_down = jax.random.normal(k2, (F, H), dtype=jnp.float32) * 0.05

    # Explicit tiles: grid = (2 token tiles, 2 FFN tiles) -> accumulator path used.
    out = glm_mlp(x, w_gate_up, w_down, tm=8, tf=128)
    out = jax.block_until_ready(out)
    ref = glm_mlp_ref(x, w_gate_up, w_down)
    assert out.shape == (T, H)
    assert jnp.allclose(out, ref, atol=1e-4, rtol=1e-4), "mismatch vs reference"

    # Default tile selection + ragged token count (exercises the padding path).
    x2 = x[:13]
    out2 = jax.block_until_ready(glm_mlp(x2, w_gate_up, w_down))
    ref2 = glm_mlp_ref(x2, w_gate_up, w_down)
    assert out2.shape == (13, H)
    assert jnp.allclose(out2, ref2, atol=1e-4, rtol=1e-4), "mismatch (padded path)"

    print("KERNEL_OK")
</pallas_src>

<mosaic_0001>
module attributes {stable_mosaic.version = 11 : i64} {
  func.func @_glm_mlp_kernel(%arg0: i32, %arg1: i32, %arg2: memref<8x128xf32, #tpu.memory_space<vmem>>, %arg3: memref<128x128xf32, #tpu.memory_space<vmem>>, %arg4: memref<128x128xf32, #tpu.memory_space<vmem>>, %arg5: memref<128x128xf32, #tpu.memory_space<vmem>>, %arg6: memref<8x128xf32, #tpu.memory_space<vmem>>, %arg7: memref<8x128xf32, #tpu.memory_space<vmem>>) attributes {dimension_semantics = [#tpu.dimension_semantics<parallel>, #tpu.dimension_semantics<arbitrary>], iteration_bounds = array<i64: 2, 2>, scalar_prefetch = 0 : i64, scratch_operands = 1 : i64, tpu.core_type = #tpu.core_type<tc>, window_params = [{transform_indices = @transform_0, window_bounds = array<i64: 8, 128>}, {transform_indices = @transform_1, window_bounds = array<i64: 128, 128>}, {transform_indices = @transform_2, window_bounds = array<i64: 128, 128>}, {transform_indices = @transform_3, window_bounds = array<i64: 128, 128>}, {transform_indices = @transform_4, window_bounds = array<i64: 8, 128>}]} {
    %c0_i32 = arith.constant 0 : i32
    %0 = arith.cmpi eq, %arg1, %c0_i32 : i32
    %1 = arith.extui %0 : i1 to i32
    %c0_i32_0 = arith.constant 0 : i32
    %2 = arith.cmpi ne, %1, %c0_i32_0 : i32
    scf.if %2 {
      %cst_16 = arith.constant 0.000000e+00 : f32
      %23 = vector.broadcast %cst_16 : f32 to vector<8x128xf32>
      %c0_17 = arith.constant 0 : index
      %c0_18 = arith.constant 0 : index
      %24 = vector.load %arg7[%c0_17, %c0_18] : memref<8x128xf32, #tpu.memory_space<vmem>>, vector<8x128xf32>
      tpu.vector_store %arg7[%c0_17, %c0_18], %23 {strides = array<i32>} : memref<8x128xf32, #tpu.memory_space<vmem>>, vector<8x128xf32>,
    } else {
    }
    %c0 = arith.constant 0 : index
    %c0_1 = arith.constant 0 : index
    %3 = vector.load %arg2[%c0, %c0_1] : memref<8x128xf32, #tpu.memory_space<vmem>>, vector<8x128xf32>
    %c0_2 = arith.constant 0 : index
    %c0_3 = arith.constant 0 : index
    %4 = vector.load %arg3[%c0_2, %c0_3] : memref<128x128xf32, #tpu.memory_space<vmem>>, vector<128x128xf32>
    %cst = arith.constant dense<0.000000e+00> : vector<8x128xf32>
    %5 = tpu.matmul %3, %4, %cst {dimension_numbers = #tpu.dot_dimension_numbers<[1], [0], [0], [1], [0, 0, 1, 1], [], []>} : vector<8x128xf32>, vector<128x128xf32>, vector<8x128xf32> -> vector<8x128xf32>
    %c0_4 = arith.constant 0 : index
    %c0_5 = arith.constant 0 : index
    %6 = vector.load %arg4[%c0_4, %c0_5] : memref<128x128xf32, #tpu.memory_space<vmem>>, vector<128x128xf32>
    %cst_6 = arith.constant dense<0.000000e+00> : vector<8x128xf32>
    %7 = tpu.matmul %3, %6, %cst_6 {dimension_numbers = #tpu.dot_dimension_numbers<[1], [0], [0], [1], [0, 0, 1, 1], [], []>} : vector<8x128xf32>, vector<128x128xf32>, vector<8x128xf32> -> vector<8x128xf32>
    %8 = arith.negf %5 : vector<8x128xf32>
    %9 = math.exp %8 : vector<8x128xf32>
    %cst_7 = arith.constant 1.000000e+00 : f32
    %10 = vector.broadcast %cst_7 : f32 to vector<8x128xf32>
    %11 = arith.addf %10, %9 : vector<8x128xf32>
    %12 = arith.divf %10, %11 : vector<8x128xf32>
    %13 = arith.mulf %5, %12 : vector<8x128xf32>
    %14 = arith.mulf %13, %7 : vector<8x128xf32>
    %c0_8 = arith.constant 0 : index
    %c0_9 = arith.constant 0 : index
    %15 = vector.load %arg7[%c0_8, %c0_9] : memref<8x128xf32, #tpu.memory_space<vmem>>, vector<8x128xf32>
    %c0_10 = arith.constant 0 : index
    %c0_11 = arith.constant 0 : index
    %16 = vector.load %arg5[%c0_10, %c0_11] : memref<128x128xf32, #tpu.memory_space<vmem>>, vector<128x128xf32>
    %cst_12 = arith.constant dense<0.000000e+00> : vector<8x128xf32>
    %17 = tpu.matmul %14, %16, %cst_12 {dimension_numbers = #tpu.dot_dimension_numbers<[1], [0], [0], [1], [0, 0, 1, 1], [], []>} : vector<8x128xf32>, vector<128x128xf32>, vector<8x128xf32> -> vector<8x128xf32>
    %18 = arith.addf %15, %17 : vector<8x128xf32>
    %c0_13 = arith.constant 0 : index
    %c0_14 = arith.constant 0 : index
    %19 = vector.load %arg7[%c0_13, %c0_14] : memref<8x128xf32, #tpu.memory_space<vmem>>, vector<8x128xf32>
    tpu.vector_store %arg7[%c0_13, %c0_14], %18 {strides = array<i32>} : memref<8x128xf32, #tpu.memory_space<vmem>>, vector<8x128xf32>,
    %c1_i32 = arith.constant 1 : i32
    %20 = arith.cmpi eq, %arg1, %c1_i32 : i32
    %21 = arith.extui %20 : i1 to i32
    %c0_i32_15 = arith.constant 0 : i32
    %22 = arith.cmpi ne, %21, %c0_i32_15 : i32
    scf.if %22 {
      %c0_16 = arith.constant 0 : index
      %c0_17 = arith.constant 0 : index
      %23 = vector.load %arg7[%c0_16, %c0_17] : memref<8x128xf32, #tpu.memory_space<vmem>>, vector<8x128xf32>
      %c0_18 = arith.constant 0 : index
      %c0_19 = arith.constant 0 : index
      %24 = vector.load %arg6[%c0_18, %c0_19] : memref<8x128xf32, #tpu.memory_space<vmem>>, vector<8x128xf32>
      tpu.vector_store %arg6[%c0_18, %c0_19], %23 {strides = array<i32>} : memref<8x128xf32, #tpu.memory_space<vmem>>, vector<8x128xf32>,
    } else {
    }
    return
  }
  func.func @transform_0(%arg0: i32, %arg1: i32) -> (i32, i32) {
    %c0_i32 = arith.constant 0 : i32
    %c0_i32_0 = arith.constant 0 : i32
    return %arg0, %c0_i32 : i32, i32
  }
  func.func @transform_1(%arg0: i32, %arg1: i32) -> (i32, i32) {
    %c0_i32 = arith.constant 0 : i32
    %c0_i32_0 = arith.constant 0 : i32
    return %c0_i32, %arg1 : i32, i32
  }
  func.func @transform_2(%arg0: i32, %arg1: i32) -> (i32, i32) {
    %c2_i32 = arith.constant 2 : i32
    %0 = arith.addi %arg1, %c2_i32 : i32
    %c0_i32 = arith.constant 0 : i32
    %c0_i32_0 = arith.constant 0 : i32
    return %c0_i32, %0 : i32, i32
  }
  func.func @transform_3(%arg0: i32, %arg1: i32) -> (i32, i32) {
    %c0_i32 = arith.constant 0 : i32
    %c0_i32_0 = arith.constant 0 : i32
    return %arg1, %c0_i32 : i32, i32
  }
  func.func @transform_4(%arg0: i32, %arg1: i32) -> (i32, i32) {
    %c0_i32 = arith.constant 0 : i32
    %c0_i32_0 = arith.constant 0 : i32
    return %arg0, %c0_i32 : i32, i32
  }
}

</mosaic_0001>

<llo_original>
// kernel: tpu_custom_call.1
$region0: #{tpu_custom_call.1}
  #allocation0 [shape = 'u32[]', space=smem, size = 0x4, offset = 0x4, fixed_abs, tag = 'smem constant byte address 0x4 - core index']
  #allocation1 [shape = 'u32[144,128]{1,0:T(1,128)}', space=vmem, size = 0x12000, scoped, tag = 'internal scratch']
  #allocation2 [shape = 'f32[8,128]{1,0:T(8,128)}', space=vmem, size = 0x1000, scoped, tag = 'scratch operand']
  %s0 = inlined_call_operand.hbm [shape: f32[16,128], index: 0, kind: input, shape index: {}]
  %s1 = inlined_call_operand.hbm [shape: f32[128,512], index: 1, kind: input, shape index: {}]
  %s2 = inlined_call_operand.hbm [shape: f32[128,512], index: 2, kind: input, shape index: {}]
  %s3 = inlined_call_operand.hbm [shape: f32[256,128], index: 3, kind: input, shape index: {}]
  %s4 = inlined_call_operand.hbm [shape: f32[16,128], index: 4, kind: output, shape index: {}]
  %s5 = sld [smem:[#allocation0]]
  $region73: #{tpu_custom_call.1} parent=0
    _
  %s7 = ssub.s32 1, %s5
  %s8 = scalar_select 0, %s7, %s5
  $region1: #{tpu_custom_call.1} parent=0
    #allocation3 [shape = 'u8[8192]{0}', space=vmem, size = 0x2000, scoped, tag = 'input window, operand 0']
    #allocation4 [shape = 's32[2]{0}', space=sflag, size = 0x8, scoped, tag = 'scoped memory for tpu_custom_call.1']
    #allocation5 [shape = 's32[2]{0}', space=sflag, size = 0x8, scoped, tag = 'scoped memory for tpu_custom_call.1']
    #allocation6 [shape = 'u8[131072]{0}', space=vmem, size = 0x20000, scoped, tag = 'input window, operand 1']
    #allocation7 [shape = 's32[2]{0}', space=sflag, size = 0x8, scoped, tag = 'scoped memory for tpu_custom_call.1']
    #allocation8 [shape = 'u8[131072]{0}', space=vmem, size = 0x20000, scoped, tag = 'input window, operand 2']
    #allocation9 [shape = 'u8[131072]{0}', space=vmem, size = 0x20000, scoped, tag = 'input window, operand 3']
    #allocation10 [shape = 's32[2]{0}', space=sflag, size = 0x8, scoped, tag = 'scoped memory for tpu_custom_call.1']
    #allocation11 [shape = 'u8[8192]{0}', space=vmem, size = 0x2000, scoped, tag = 'output window, operand 0']
    %9 = vsyncpa [#allocation4], 0
    %s10 = scalar_lea.sflag [#allocation4], 1
    %11 = vsyncpa %s10, 0
    %12 = vsyncpa [#allocation7], 0
    %s13 = scalar_lea.sflag [#allocation7], 1
    %14 = vsyncpa %s13, 0
    %15 = vsyncpa [#allocation10], 0
    %s16 = scalar_lea.sflag [#allocation10], 1
    %17 = vsyncpa %s16, 0
    %18 = vsyncpa [#allocation5], 0
    %s19 = scalar_lea.sflag [#allocation5], 1
    %20 = vsyncpa %s19, 0
    loop: start=0, step=1, limit=6
    $region2: #{tpu_custom_call.1} parent=1 // loop_pre_header
      _
    $region3: #{tpu_custom_call.1} parent=1 // loop_header
      %s22 = sphi 0, %s26
      %p23 = scmp.ge.s32.totalorder %s22, 6
      %s29 = sphi 0, %s41
      %s30 = sphi 0, %s37
      %s31 = sphi 0, %s29
      %s32 = sphi 0, %s30
      %s33 = sphi 0, %s31
      %s34 = sphi 0, %s32
      %s44 = sphi 0, %s46
      %s47 = sphi 0, %s44
      %s48 = sphi 0, %s47
      %s64 = sphi 0, %s48
      %s70 = sphi 0, %s72
      %s73 = sphi 0, %s70
      %s74 = sphi 0, %s73
      %s90 = sphi 0, %s74
      %s98 = sphi 0, %s100
      %s101 = sphi 0, %s98
      %s102 = sphi 0, %s101
      %s118 = sphi 0, %s102
      %s124 = sphi 0, %s126
      %s127 = sphi 0, %s124
      %s128 = sphi 0, %s127
      %s144 = sphi 0, %s128
      %s150 = sphi 0, %s152
      %s153 = sphi 0, %s150
      %s154 = sphi 0, %s153
      %s170 = sphi 0, %s154
    $region4: #{tpu_custom_call.1} parent=1 // loop_header_branch
      %25 = sbr.rel (%p23) target = $region8
    $region5: #{tpu_custom_call.1} parent=1 // loop_body
      %s27 = ssub.s32 %s22, 1
      %s28 = ssub.s32 %s22, 2
      %s35 = sadd.s32 1, %s30
      %p36 = scmp.ge.s32.totalorder %s35, 2
      %s37 = scalar_select %p36, 0, %s35
      %s38 = sadd.s32 1, %s29
      %s39 = scalar_select %p36, %s38, %s29
      %p40 = scmp.ge.s32.totalorder %s39, 2
      %s41 = scalar_select %p40, 0, %s39
      %s42 = ssub.s32 %s29, %s41
      %p43 = scmp.eq.s32.totalorder %s42, 0
      %s45 = sadd.s32 %s44, 1
      %s46 = scalar_select %p43, %s44, %s45
      %p49 = pneg %p43
      %p50 = scmp.eq.s32.totalorder %s22, 3
      %p51 = por %p49, %p50
      %p52 = scmp.ne.s32.totalorder %s44, %s47
      %p53 = scmp.eq.s32.totalorder %s22, 0
      %p54 = por %p52, %p53
      %p55 = scmp.ne.s32.totalorder %s44, %s47
      %p56 = scmp.eq.s32.totalorder %s27, 3
      %p57 = por %p55, %p56
      %p58 = scmp.ne.s32.totalorder %s47, %s48
      %p59 = scmp.eq.s32.totalorder %s27, 0
      %p60 = por %p58, %p59
      %p61 = scmp.ne.s32.totalorder %s47, %s48
      %p62 = scmp.eq.s32.totalorder %s28, 3
      %p63 = por %p61, %p62
      %p65 = scmp.ne.s32.totalorder %s48, %s64
      %p66 = scmp.eq.s32.totalorder %s28, 0
      %p67 = por %p65, %p66
      %s68 = ssub.s32 %s30, %s37
      %p69 = scmp.eq.s32.totalorder %s68, 0
      %s71 = sadd.s32 %s70, 1
      %s72 = scalar_select %p69, %s70, %s71
      %p75 = pneg %p69
      %p76 = scmp.eq.s32.totalorder %s22, 3
      %p77 = por %p75, %p76
      %p78 = scmp.ne.s32.totalorder %s70, %s73
      %p79 = scmp.eq.s32.totalorder %s22, 0
      %p80 = por %p78, %p79
      %p81 = scmp.ne.s32.totalorder %s70, %s73
      %p82 = scmp.eq.s32.totalorder %s27, 3
      %p83 = por %p81, %p82
      %p84 = scmp.ne.s32.totalorder %s73, %s74
      %p85 = scmp.eq.s32.totalorder %s27, 0
      %p86 = por %p84, %p85
      %p87 = scmp.ne.s32.totalorder %s73, %s74
      %p88 = scmp.eq.s32.totalorder %s28, 3
      %p89 = por %p87, %p88
      %p91 = scmp.ne.s32.totalorder %s74, %s90
      %p92 = scmp.eq.s32.totalorder %s28, 0
      %p93 = por %p91, %p92
      %s94 = sadd.s32 %s30, 2
      %s95 = sadd.s32 %s37, 2
      %s96 = ssub.s32 %s94, %s95
      %p97 = scmp.eq.s32.totalorder %s96, 0
      %s99 = sadd.s32 %s98, 1
      %s100 = scalar_select %p97, %s98, %s99
      %p103 = pneg %p97
      %p104 = scmp.eq.s32.totalorder %s22, 3
      %p105 = por %p103, %p104
      %p106 = scmp.ne.s32.totalorder %s98, %s101
      %p107 = scmp.eq.s32.totalorder %s22, 0
      %p108 = por %p106, %p107
      %p109 = scmp.ne.s32.totalorder %s98, %s101
      %p110 = scmp.eq.s32.totalorder %s27, 3
      %p111 = por %p109, %p110
      %p112 = scmp.ne.s32.totalorder %s101, %s102
      %p113 = scmp.eq.s32.totalorder %s27, 0
      %p114 = por %p112, %p113
      %p115 = scmp.ne.s32.totalorder %s101, %s102
      %p116 = scmp.eq.s32.totalorder %s28, 3
      %p117 = por %p115, %p116
      %p119 = scmp.ne.s32.totalorder %s102, %s118
      %p120 = scmp.eq.s32.totalorder %s28, 0
      %p121 = por %p119, %p120
      %s122 = ssub.s32 %s30, %s37
      %p123 = scmp.eq.s32.totalorder %s122, 0
      %s125 = sadd.s32 %s124, 1
      %s126 = scalar_select %p123, %s124, %s125
      %p129 = pneg %p123
      %p130 = scmp.eq.s32.totalorder %s22, 3
      %p131 = por %p129, %p130
      %p132 = scmp.ne.s32.totalorder %s124, %s127
      %p133 = scmp.eq.s32.totalorder %s22, 0
      %p134 = por %p132, %p133
      %p135 = scmp.ne.s32.totalorder %s124, %s127
      %p136 = scmp.eq.s32.totalorder %s27, 3
      %p137 = por %p135, %p136
      %p138 = scmp.ne.s32.totalorder %s127, %s128
      %p139 = scmp.eq.s32.totalorder %s27, 0
      %p140 = por %p138, %p139
      %p141 = scmp.ne.s32.totalorder %s127, %s128
      %p142 = scmp.eq.s32.totalorder %s28, 3
      %p143 = por %p141, %p142
      %p145 = scmp.ne.s32.totalorder %s128, %s144
      %p146 = scmp.eq.s32.totalorder %s28, 0
      %p147 = por %p145, %p146
      %s148 = ssub.s32 %s29, %s41
      %p149 = scmp.eq.s32.totalorder %s148, 0
      %s151 = sadd.s32 %s150, 1
      %s152 = scalar_select %p149, %s150, %s151
      %p155 = pneg %p149
      %p156 = scmp.eq.s32.totalorder %s22, 3
      %p157 = por %p155, %p156
      %p158 = scmp.ne.s32.totalorder %s150, %s153
      %p159 = scmp.eq.s32.totalorder %s22, 0
      %p160 = por %p158, %p159
      %p161 = scmp.ne.s32.totalorder %s150, %s153
      %p162 = scmp.eq.s32.totalorder %s27, 3
      %p163 = por %p161, %p162
      %p164 = scmp.ne.s32.totalorder %s153, %s154
      %p165 = scmp.eq.s32.totalorder %s27, 0
      %p166 = por %p164, %p165
      %p167 = scmp.ne.s32.totalorder %s153, %s154
      %p168 = scmp.eq.s32.totalorder %s28, 3
      %p169 = por %p167, %p168
      %p171 = scmp.ne.s32.totalorder %s154, %s170
      %p172 = scmp.eq.s32.totalorder %s28, 0
      %p173 = por %p171, %p172
      %p174 = scmp.le.s32.totalorder 1, %s22
      %p175 = scmp.lt.s32.totalorder %s22, 5
      %p176 = pnand %p174, %p175
      %p177 = pneg %p176
      // Predicated region
      $region9: #{tpu_custom_call.1} parent=5 // pred_check
        _
      $region10: #{tpu_custom_call.1} parent=5 // pred_check_branch
        %179 = sbr.rel (%p176) target = $region12
      $region11: #{tpu_custom_call.1} parent=5 // pred_region
        %s180 = ssub.s32 %s22, 1
      $region12: #{tpu_custom_call.1} parent=5 // pred_fallthru
        _
      %p181 = scmp.lt.s32.totalorder %s22, 4
      // Predicated region
      $region13: #{tpu_custom_call.1} parent=5 // pred_check
        %p182 = pneg %p181
      $region14: #{tpu_custom_call.1} parent=5 // pred_check_branch
        %184 = sbr.rel (%p182) target = $region16
      $region15: #{tpu_custom_call.1} parent=5 // pred_region
        // Predicated region
        $region17: #{tpu_custom_call.1} parent=15 // pred_check
          %p185 = pneg %p54
        $region18: #{tpu_custom_call.1} parent=15 // pred_check_branch
          %187 = sbr.rel (%p185) target = $region20
        $region19: #{tpu_custom_call.1} parent=15 // pred_region
          %s188 = sand.u32 %s44, 1
          %s189 = scalar_lea.sflag [#allocation4], %s188
          %s190 = sand.u32 %s44, 1
          %s191 = smul.addr %s190, 8
          %s192 = scalar_lea.vmem [#allocation3], %s191
          %s194 = ssub.s32 128, 128
          %195 = vsyncadd %s189, %s194
          %s196 = smul.addr %s29, 128
          %s197 = scalar_lea.hbm %s0, %s196
          %s199 = sshll.u32 %s192, 4
          %s200 = int_to_ptr.vmem [resolvable:$true] %s199
          %202 = dma.hbm_to_vmem [thread:$0]  %s197, 128, %s200, %s189
        $region20: #{tpu_custom_call.1} parent=15 // pred_fallthru
          _
        // Predicated region
        $region21: #{tpu_custom_call.1} parent=15 // pred_check
          %p203 = pneg %p80
        $region22: #{tpu_custom_call.1} parent=15 // pred_check_branch
          %205 = sbr.rel (%p203) target = $region24
        $region23: #{tpu_custom_call.1} parent=15 // pred_region
          %s206 = sand.u32 %s22, 1
          %s207 = scalar_lea.sflag [#allocation7], %s206
          %s208 = sand.u32 %s70, 1
          %s209 = smul.addr %s208, 128
          %s210 = scalar_lea.vmem [#allocation6], %s209
          %s212 = ssub.s32 2048, 2048
          %213 = vsyncadd %s207, %s212
          %s214 = smul.addr %s30, 128
          %s215 = scalar_lea.hbm %s1, %s214
          %s216 = sshll.u32 %s210, 4
          %s217 = int_to_ptr.vmem [resolvable:$true] %s216
          %222 = dma.hbm_to_vmem [thread:$0]  %s215, 2048, %s217, %s207, 512, 128, 8
        $region24: #{tpu_custom_call.1} parent=15 // pred_fallthru
          _
        // Predicated region
        $region25: #{tpu_custom_call.1} parent=15 // pred_check
          %p223 = pneg %p108
        $region26: #{tpu_custom_call.1} parent=15 // pred_check_branch
          %225 = sbr.rel (%p223) target = $region28
        $region27: #{tpu_custom_call.1} parent=15 // pred_region
          %s226 = sand.u32 %s22, 1
          %s227 = scalar_lea.sflag [#allocation7], %s226
          %s228 = sand.u32 %s98, 1
          %s229 = smul.addr %s228, 128
          %s230 = scalar_lea.vmem [#allocation8], %s229
          %s231 = sadd.s32 %s30, 2
          %s233 = ssub.s32 2048, 2048
          %234 = vsyncadd %s227, %s233
          %s235 = smul.addr %s231, 128
          %s236 = scalar_lea.hbm %s2, %s235
          %s237 = sshll.u32 %s230, 4
          %s238 = int_to_ptr.vmem [resolvable:$true] %s237
          %243 = dma.hbm_to_vmem [thread:$0]  %s236, 2048, %s238, %s227, 512, 128, 8
        $region28: #{tpu_custom_call.1} parent=15 // pred_fallthru
          _
        // Predicated region
        $region29: #{tpu_custom_call.1} parent=15 // pred_check
          %p244 = pneg %p134
        $region30: #{tpu_custom_call.1} parent=15 // pred_check_branch
          %246 = sbr.rel (%p244) target = $region32
        $region31: #{tpu_custom_call.1} parent=15 // pred_region
          %s247 = sand.u32 %s124, 1
          %s248 = scalar_lea.sflag [#allocation10], %s247
          %s249 = sand.u32 %s124, 1
          %s250 = smul.addr %s249, 128
          %s251 = scalar_lea.vmem [#allocation9], %s250
          %s252 = smul.u32 16, %s30
          %s254 = ssub.s32 2048, 2048
          %255 = vsyncadd %s248, %s254
          %s256 = smul.addr %s252, 128
          %s257 = scalar_lea.hbm %s3, %s256
          %s258 = sshll.u32 %s251, 4
          %s259 = int_to_ptr.vmem [resolvable:$true] %s258
          %264 = dma.hbm_to_vmem [thread:$0]  %s257, 2048, %s259, %s248, 128, 128, 8
        $region32: #{tpu_custom_call.1} parent=15 // pred_fallthru
          _
      $region16: #{tpu_custom_call.1} parent=5 // pred_fallthru
        _
      %p265 = scmp.le.s32.totalorder 1, %s22
      %p266 = scmp.lt.s32.totalorder %s22, 5
      %p267 = pnand %p265, %p266
      %p268 = pneg %p267
      // Predicated region
      $region33: #{tpu_custom_call.1} parent=5 // pred_check
        _
      $region34: #{tpu_custom_call.1} parent=5 // pred_check_branch
        %270 = sbr.rel (%p267) target = $region36
      $region35: #{tpu_custom_call.1} parent=5 // pred_region
        %s271 = ssub.s32 %s22, 1
        %s272 = sand.u32 %s47, 1
        %s273 = scalar_lea.sflag [#allocation4], %s272
        %s274 = sand.u32 %s47, 1
        %s275 = smul.addr %s274, 8
        %s276 = scalar_lea.vmem [#allocation3], %s275
        // Predicated region
        $region37: #{tpu_custom_call.1} parent=35 // pred_check
          %p277 = pneg %p60
        $region38: #{tpu_custom_call.1} parent=35 // pred_check_branch
          %279 = sbr.rel (%p277) target = $region40
        $region39: #{tpu_custom_call.1} parent=35 // pred_region
          %280 = dma.done %s273, 128
        $region40: #{tpu_custom_call.1} parent=35 // pred_fallthru
          _
        %s281 = sand.u32 %s27, 1
        %s282 = scalar_lea.sflag [#allocation7], %s281
        %s283 = sand.u32 %s73, 1
        %s284 = smul.addr %s283, 128
        %s285 = scalar_lea.vmem [#allocation6], %s284
        // Predicated region
        $region41: #{tpu_custom_call.1} parent=35 // pred_check
          %p286 = pneg %p86
        $region42: #{tpu_custom_call.1} parent=35 // pred_check_branch
          %288 = sbr.rel (%p286) target = $region44
        $region43: #{tpu_custom_call.1} parent=35 // pred_region
          %289 = dma.done %s282, 2048
        $region44: #{tpu_custom_call.1} parent=35 // pred_fallthru
          _
        %s290 = sand.u32 %s27, 1
        %s291 = scalar_lea.sflag [#allocation7], %s290
        %s292 = sand.u32 %s101, 1
        %s293 = smul.addr %s292, 128
        %s294 = scalar_lea.vmem [#allocation8], %s293
        // Predicated region
        $region45: #{tpu_custom_call.1} parent=35 // pred_check
          %p295 = pneg %p114
        $region46: #{tpu_custom_call.1} parent=35 // pred_check_branch
          %297 = sbr.rel (%p295) target = $region48
        $region47: #{tpu_custom_call.1} parent=35 // pred_region
          %298 = dma.done %s291, 2048
        $region48: #{tpu_custom_call.1} parent=35 // pred_fallthru
          _
        %s299 = sand.u32 %s127, 1
        %s300 = scalar_lea.sflag [#allocation10], %s299
        %s301 = sand.u32 %s127, 1
        %s302 = smul.addr %s301, 128
        %s303 = scalar_lea.vmem [#allocation9], %s302
        // Predicated region
        $region49: #{tpu_custom_call.1} parent=35 // pred_check
          %p304 = pneg %p140
        $region50: #{tpu_custom_call.1} parent=35 // pred_check_branch
          %306 = sbr.rel (%p304) target = $region52
        $region51: #{tpu_custom_call.1} parent=35 // pred_region
          %307 = dma.done %s300, 2048
        $region52: #{tpu_custom_call.1} parent=35 // pred_fallthru
          _
        %s308 = sand.u32 %s47, 1
        %s309 = scalar_lea.sflag [#allocation4], %s308
        %s310 = sand.u32 %s47, 1
        %s311 = smul.addr %s310, 8
        %s312 = scalar_lea.vmem [#allocation3], %s311
        %p313 = pneg %p60
        %p314 = pneg %p57
        %s315 = sand.u32 %s27, 1
        %s316 = scalar_lea.sflag [#allocation7], %s315
        %s317 = sand.u32 %s73, 1
        %s318 = smul.addr %s317, 128
        %s319 = scalar_lea.vmem [#allocation6], %s318
        %p320 = pneg %p86
        %p321 = pneg %p83
        %s322 = sand.u32 %s27, 1
        %s323 = scalar_lea.sflag [#allocation7], %s322
        %s324 = sand.u32 %s101, 1
        %s325 = smul.addr %s324, 128
        %s326 = scalar_lea.vmem [#allocation8], %s325
        %p327 = pneg %p114
        %p328 = pneg %p111
        %s329 = sand.u32 %s127, 1
        %s330 = scalar_lea.sflag [#allocation10], %s329
        %s331 = sand.u32 %s127, 1
        %s332 = smul.addr %s331, 128
        %s333 = scalar_lea.vmem [#allocation9], %s332
        %p334 = pneg %p140
        %p335 = pneg %p137
        %p336 = pneg %p166
        %p337 = pneg %p163
        %s338 = sand.u32 %s153, 1
        %s339 = scalar_lea.sflag [#allocation5], %s338
        %s340 = sand.u32 %s153, 1
        %s341 = smul.addr %s340, 8
        %s342 = scalar_lea.vmem [#allocation11], %s341
        %s343 = sadd.s32 %s32, 2
        %s344 = smul.u32 16, %s32
        %p345 = scmp.eq.s32.totalorder %s32, 0
        // Predicated region
        $region53: #{tpu_custom_call.1} parent=35 // pred_check
          %p346 = pneg %p345
        $region54: #{tpu_custom_call.1} parent=35 // pred_check_branch
          %348 = sbr.rel (%p346) target = $region56
        $region55: #{tpu_custom_call.1} parent=35 // pred_region
          %349 = vst [vmem:[#allocation2] sm:$0xff] 0.0
        $region56: #{tpu_custom_call.1} parent=35 // pred_fallthru
          _
        %v350 = vld [vmem:[%s276] sm:$0xff]
        %v351 = vld [vmem:[%s285] sm:$0xff]
        %v352 = vld [vmem:[%s285 + $0x8] sm:$0xff]
        %v353 = vld [vmem:[%s285 + $0x10] sm:$0xff]
        %v354 = vld [vmem:[%s285 + $0x18] sm:$0xff]
        %v355 = vld [vmem:[%s285 + $0x20] sm:$0xff]
        %v356 = vld [vmem:[%s285 + $0x28] sm:$0xff]
        %v357 = vld [vmem:[%s285 + $0x30] sm:$0xff]
        %v358 = vld [vmem:[%s285 + $0x38] sm:$0xff]
        %v359 = vld [vmem:[%s285 + $0x40] sm:$0xff]
        %v360 = vld [vmem:[%s285 + $0x48] sm:$0xff]
        %v361 = vld [vmem:[%s285 + $0x50] sm:$0xff]
        %v362 = vld [vmem:[%s285 + $0x58] sm:$0xff]
        %v363 = vld [vmem:[%s285 + $0x60] sm:$0xff]
        %v364 = vld [vmem:[%s285 + $0x68] sm:$0xff]
        %v365 = vld [vmem:[%s285 + $0x70] sm:$0xff]
        %v366 = vld [vmem:[%s285 + $0x78] sm:$0xff]
        %367 = vmatprep.subr.mxu0 0.0
        %368 = vmatpush1.msra.mxu0 %v351
        %369 = vmatprep.subr.mxu0 0.0
        %370 = vmatpush1.msra.mxu0 %v352
        %371 = vmatprep.subr.mxu0 0.0
        %372 = vmatpush1.msra.mxu0 %v353
        %373 = vmatprep.subr.mxu0 0.0
        %374 = vmatpush1.msra.mxu0 %v354
        %375 = vmatprep.subr.mxu0 0.0
        %376 = vmatpush1.msra.mxu0 %v355
        %377 = vmatprep.subr.mxu0 0.0
        %378 = vmatpush1.msra.mxu0 %v356
        %379 = vmatprep.subr.mxu0 0.0
        %380 = vmatpush1.msra.mxu0 %v357
        %381 = vmatprep.subr.mxu0 0.0
        %382 = vmatpush1.msra.mxu0 %v358
        %383 = vmatprep.subr.mxu0 0.0
        %384 = vmatpush1.msra.mxu0 %v359
        %385 = vmatprep.subr.mxu0 0.0
        %386 = vmatpush1.msra.mxu0 %v360
        %387 = vmatprep.subr.mxu0 0.0
        %388 = vmatpush1.msra.mxu0 %v361
        %389 = vmatprep.subr.mxu0 0.0
        %390 = vmatpush1.msra.mxu0 %v362
        %391 = vmatprep.subr.mxu0 0.0
        %392 = vmatpush1.msra.mxu0 %v363
        %393 = vmatprep.subr.mxu0 0.0
        %394 = vmatpush1.msra.mxu0 %v364
        %395 = vmatprep.subr.mxu0 0.0
        %396 = vmatpush1.msra.mxu0 %v365
        %397 = vmatprep.subr.mxu0 0.0
        %398 = vmatpush1.msra.mxu0 %v366
        %399 = vmatprep.subr.mxu0 0.0
        %400 = vmatpush1.msra.mxu0 0.0
        %401 = vmatprep.subr.mxu0 0.0
        %402 = vmatpush1.msra.mxu0 0.0
        %403 = vmatprep.subr.mxu0 0.0
        %404 = vmatpush1.msra.mxu0 0.0
        %405 = vmatprep.subr.mxu0 0.0
        %406 = vmatpush1.msra.mxu0 0.0
        %407 = vmatprep.subr.mxu0 0.0
        %408 = vmatpush1.msra.mxu0 0.0
        %409 = vmatprep.subr.mxu0 0.0
        %410 = vmatpush1.msra.mxu0 0.0
        %411 = vmatprep.subr.mxu0 0.0
        %412 = vmatpush1.msra.mxu0 0.0
        %413 = vmatprep.subr.mxu0 0.0
        %414 = vmatpush1.msra.mxu0 0.0
        %415 = vmatprep.subr.mxu0 0.0
        %416 = vmatpush1.msra.mxu0 0.0
        %417 = vmatprep.subr.mxu0 0.0
        %418 = vmatpush1.msra.mxu0 0.0
        %419 = vmatprep.subr.mxu0 0.0
        %420 = vmatpush1.msra.mxu0 0.0
        %421 = vmatprep.subr.mxu0 0.0
        %422 = vmatpush1.msra.mxu0 0.0
        %423 = vmatprep.subr.mxu0 0.0
        %424 = vmatpush1.msra.mxu0 0.0
        %425 = vmatprep.subr.mxu0 0.0
        %426 = vmatpush1.msra.mxu0 0.0
        %427 = vmatprep.subr.mxu0 0.0
        %428 = vmatpush1.msra.mxu0 0.0
        %429 = vmatprep.subr.mxu0 0.0
        %430 = vmatpush1.msra.mxu0 0.0
        %431 = vmatprep.mubr.f32.mxu0 0.0
        %432 = vmatmul.mubr.f32.gmra.mrb[0].mxu0 %v350
        %v433 = vpop.f32.mrb[0].mxu0
        %v434 = vadd.f32 0.0, %v433
        %v435 = vpop.f32.mrb[0].mxu0
        %436 = vdwg.mxu0
        %v437 = vld [vmem:[%s294] sm:$0xff]
        %v438 = vld [vmem:[%s294 + $0x8] sm:$0xff]
        %v439 = vld [vmem:[%s294 + $0x10] sm:$0xff]
        %v440 = vld [vmem:[%s294 + $0x18] sm:$0xff]
        %v441 = vld [vmem:[%s294 + $0x20] sm:$0xff]
        %v442 = vld [vmem:[%s294 + $0x28] sm:$0xff]
        %v443 = vld [vmem:[%s294 + $0x30] sm:$0xff]
        %v444 = vld [vmem:[%s294 + $0x38] sm:$0xff]
        %v445 = vld [vmem:[%s294 + $0x40] sm:$0xff]
        %v446 = vld [vmem:[%s294 + $0x48] sm:$0xff]
        %v447 = vld [vmem:[%s294 + $0x50] sm:$0xff]
        %v448 = vld [vmem:[%s294 + $0x58] sm:$0xff]
        %v449 = vld [vmem:[%s294 + $0x60] sm:$0xff]
        %v450 = vld [vmem:[%s294 + $0x68] sm:$0xff]
        %v451 = vld [vmem:[%s294 + $0x70] sm:$0xff]
        %v452 = vld [vmem:[%s294 + $0x78] sm:$0xff]
        %453 = vmatprep.subr.mxu0 0.0
        %454 = vmatpush1.msra.mxu0 %v437
        %455 = vmatprep.subr.mxu0 0.0
        %456 = vmatpush1.msra.mxu0 %v438
        %457 = vmatprep.subr.mxu0 0.0
        %458 = vmatpush1.msra.mxu0 %v439
        %459 = vmatprep.subr.mxu0 0.0
        %460 = vmatpush1.msra.mxu0 %v440
        %461 = vmatprep.subr.mxu0 0.0
        %462 = vmatpush1.msra.mxu0 %v441
        %463 = vmatprep.subr.mxu0 0.0
        %464 = vmatpush1.msra.mxu0 %v442
        %465 = vmatprep.subr.mxu0 0.0
        %466 = vmatpush1.msra.mxu0 %v443
        %467 = vmatprep.subr.mxu0 0.0
        %468 = vmatpush1.msra.mxu0 %v444
        %469 = vmatprep.subr.mxu0 0.0
        %470 = vmatpush1.msra.mxu0 %v445
        %471 = vmatprep.subr.mxu0 0.0
        %472 = vmatpush1.msra.mxu0 %v446
        %473 = vmatprep.subr.mxu0 0.0
        %474 = vmatpush1.msra.mxu0 %v447
        %475 = vmatprep.subr.mxu0 0.0
        %476 = vmatpush1.msra.mxu0 %v448
        %477 = vmatprep.subr.mxu0 0.0
        %478 = vmatpush1.msra.mxu0 %v449
        %479 = vmatprep.subr.mxu0 0.0
        %480 = vmatpush1.msra.mxu0 %v450
        %481 = vmatprep.subr.mxu0 0.0
        %482 = vmatpush1.msra.mxu0 %v451
        %483 = vmatprep.subr.mxu0 0.0
        %484 = vmatpush1.msra.mxu0 %v452
        %485 = vmatprep.subr.mxu0 0.0
        %486 = vmatpush1.msra.mxu0 0.0
        %487 = vmatprep.subr.mxu0 0.0
        %488 = vmatpush1.msra.mxu0 0.0
        %489 = vmatprep.subr.mxu0 0.0
        %490 = vmatpush1.msra.mxu0 0.0
        %491 = vmatprep.subr.mxu0 0.0
        %492 = vmatpush1.msra.mxu0 0.0
        %493 = vmatprep.subr.mxu0 0.0
        %494 = vmatpush1.msra.mxu0 0.0
        %495 = vmatprep.subr.mxu0 0.0
        %496 = vmatpush1.msra.mxu0 0.0
        %497 = vmatprep.subr.mxu0 0.0
        %498 = vmatpush1.msra.mxu0 0.0
        %499 = vmatprep.subr.mxu0 0.0
        %500 = vmatpush1.msra.mxu0 0.0
        %501 = vmatprep.subr.mxu0 0.0
        %502 = vmatpush1.msra.mxu0 0.0
        %503 = vmatprep.subr.mxu0 0.0
        %504 = vmatpush1.msra.mxu0 0.0
        %505 = vmatprep.subr.mxu0 0.0
        %506 = vmatpush1.msra.mxu0 0.0
        %507 = vmatprep.subr.mxu0 0.0
        %508 = vmatpush1.msra.mxu0 0.0
        %509 = vmatprep.subr.mxu0 0.0
        %510 = vmatpush1.msra.mxu0 0.0
        %511 = vmatprep.subr.mxu0 0.0
        %512 = vmatpush1.msra.mxu0 0.0
        %513 = vmatprep.subr.mxu0 0.0
        %514 = vmatpush1.msra.mxu0 0.0
        %515 = vmatprep.subr.mxu0 0.0
        %516 = vmatpush1.msra.mxu0 0.0
        %517 = vmatprep.mubr.f32.mxu0 0.0
        %518 = vmatmul.mubr.f32.gmra.mrb[0].mxu0 %v350
        %v519 = vpop.f32.mrb[0].mxu0
        %v520 = vadd.f32 0.0, %v519
        %v521 = vpop.f32.mrb[0].mxu0
        %522 = vdwg.mxu0
        %v523 = vxor.u32 %v434, 2147483648
        %v524 = vmul.f32 %v523, 1.442695
        %v525 = vpow.pop %v524
        %v526 = vadd.f32 %v525, 1.0
        %v527 = vrcp.pop %v526
        %v528 = vmul.f32 1.0, %v527
        %v529 = vmul.f32 %v434, %v528
        %v530 = vmul.f32 %v529, %v520
        %v531 = vld [vmem:[#allocation2] sm:$0xff]
        %v532 = vld [vmem:[%s303] sm:$0xff]
        %v533 = vld [vmem:[%s303 + $0x8] sm:$0xff]
        %v534 = vld [vmem:[%s303 + $0x10] sm:$0xff]
        %v535 = vld [vmem:[%s303 + $0x18] sm:$0xff]
        %v536 = vld [vmem:[%s303 + $0x20] sm:$0xff]
        %v537 = vld [vmem:[%s303 + $0x28] sm:$0xff]
        %v538 = vld [vmem:[%s303 + $0x30] sm:$0xff]
        %v539 = vld [vmem:[%s303 + $0x38] sm:$0xff]
        %v540 = vld [vmem:[%s303 + $0x40] sm:$0xff]
        %v541 = vld [vmem:[%s303 + $0x48] sm:$0xff]
        %v542 = vld [vmem:[%s303 + $0x50] sm:$0xff]
        %v543 = vld [vmem:[%s303 + $0x58] sm:$0xff]
        %v544 = vld [vmem:[%s303 + $0x60] sm:$0xff]
        %v545 = vld [vmem:[%s303 + $0x68] sm:$0xff]
        %v546 = vld [vmem:[%s303 + $0x70] sm:$0xff]
        %v547 = vld [vmem:[%s303 + $0x78] sm:$0xff]
        %548 = vmatprep.subr.mxu0 0.0
        %549 = vmatpush1.msra.mxu0 %v532
        %550 = vmatprep.subr.mxu0 0.0
        %551 = vmatpush1.msra.mxu0 %v533
        %552 = vmatprep.subr.mxu0 0.0
        %553 = vmatpush1.msra.mxu0 %v534
        %554 = vmatprep.subr.mxu0 0.0
        %555 = vmatpush1.msra.mxu0 %v535
        %556 = vmatprep.subr.mxu0 0.0
        %557 = vmatpush1.msra.mxu0 %v536
        %558 = vmatprep.subr.mxu0 0.0
        %559 = vmatpush1.msra.mxu0 %v537
        %560 = vmatprep.subr.mxu0 0.0
        %561 = vmatpush1.msra.mxu0 %v538
        %562 = vmatprep.subr.mxu0 0.0
        %563 = vmatpush1.msra.mxu0 %v539
        %564 = vmatprep.subr.mxu0 0.0
        %565 = vmatpush1.msra.mxu0 %v540
        %566 = vmatprep.subr.mxu0 0.0
        %567 = vmatpush1.msra.mxu0 %v541
        %568 = vmatprep.subr.mxu0 0.0
        %569 = vmatpush1.msra.mxu0 %v542
        %570 = vmatprep.subr.mxu0 0.0
        %571 = vmatpush1.msra.mxu0 %v543
        %572 = vmatprep.subr.mxu0 0.0
        %573 = vmatpush1.msra.mxu0 %v544
        %574 = vmatprep.subr.mxu0 0.0
        %575 = vmatpush1.msra.mxu0 %v545
        %576 = vmatprep.subr.mxu0 0.0
        %577 = vmatpush1.msra.mxu0 %v546
        %578 = vmatprep.subr.mxu0 0.0
        %579 = vmatpush1.msra.mxu0 %v547
        %580 = vmatprep.subr.mxu0 0.0
        %581 = vmatpush1.msra.mxu0 0.0
        %582 = vmatprep.subr.mxu0 0.0
        %583 = vmatpush1.msra.mxu0 0.0
        %584 = vmatprep.subr.mxu0 0.0
        %585 = vmatpush1.msra.mxu0 0.0
        %586 = vmatprep.subr.mxu0 0.0
        %587 = vmatpush1.msra.mxu0 0.0
        %588 = vmatprep.subr.mxu0 0.0
        %589 = vmatpush1.msra.mxu0 0.0
        %590 = vmatprep.subr.mxu0 0.0
        %591 = vmatpush1.msra.mxu0 0.0
        %592 = vmatprep.subr.mxu0 0.0
        %593 = vmatpush1.msra.mxu0 0.0
        %594 = vmatprep.subr.mxu0 0.0
        %595 = vmatpush1.msra.mxu0 0.0
        %596 = vmatprep.subr.mxu0 0.0
        %597 = vmatpush1.msra.mxu0 0.0
        %598 = vmatprep.subr.mxu0 0.0
        %599 = vmatpush1.msra.mxu0 0.0
        %600 = vmatprep.subr.mxu0 0.0
        %601 = vmatpush1.msra.mxu0 0.0
        %602 = vmatprep.subr.mxu0 0.0
        %603 = vmatpush1.msra.mxu0 0.0
        %604 = vmatprep.subr.mxu0 0.0
        %605 = vmatpush1.msra.mxu0 0.0
        %606 = vmatprep.subr.mxu0 0.0
        %607 = vmatpush1.msra.mxu0 0.0
        %608 = vmatprep.subr.mxu0 0.0
        %609 = vmatpush1.msra.mxu0 0.0
        %610 = vmatprep.subr.mxu0 0.0
        %611 = vmatpush1.msra.mxu0 0.0
        %612 = vmatprep.mubr.f32.mxu0 0.0
        %613 = vmatmul.mubr.f32.gmra.mrb[0].mxu0 %v530
        %v614 = vpop.f32.mrb[0].mxu0
        %v615 = vadd.f32 0.0, %v614
        %v616 = vpop.f32.mrb[0].mxu0
        %617 = vdwg.mxu0
        %v618 = vadd.f32 %v531, %v615
        %619 = vst [vmem:[#allocation2] sm:$0xff] %v618
        %p620 = scmp.eq.s32.totalorder %s32, 1
        // Predicated region
        $region57: #{tpu_custom_call.1} parent=35 // pred_check
          %p621 = pneg %p620
        $region58: #{tpu_custom_call.1} parent=35 // pred_check_branch
          %623 = sbr.rel (%p621) target = $region60
        $region59: #{tpu_custom_call.1} parent=35 // pred_region
          %v624 = vld [vmem:[#allocation2] sm:$0xff]
          %625 = vst [vmem:[%s342] sm:$0xff] %v624
        $region60: #{tpu_custom_call.1} parent=35 // pred_fallthru
          _
        %s626 = sand.u32 %s153, 1
        %s627 = scalar_lea.sflag [#allocation5], %s626
        %s628 = sand.u32 %s153, 1
        %s629 = smul.addr %s628, 8
        %s630 = scalar_lea.vmem [#allocation11], %s629
        // Predicated region
        $region61: #{tpu_custom_call.1} parent=35 // pred_check
          %p631 = pneg %p163
        $region62: #{tpu_custom_call.1} parent=35 // pred_check_branch
          %633 = sbr.rel (%p631) target = $region64
        $region63: #{tpu_custom_call.1} parent=35 // pred_region
          %s635 = ssub.s32 128, 128
          %636 = vsyncadd %s627, %s635
          %s637 = smul.addr %s31, 128
          %s638 = scalar_lea.hbm %s4, %s637
          %s640 = sshll.u32 %s630, 4
          %s641 = int_to_ptr.vmem [resolvable:$true] %s640
          %643 = dma.vmem_to_hbm [thread:$0]  %s641, 128, %s638, %s627
        $region64: #{tpu_custom_call.1} parent=35 // pred_fallthru
          _
      $region36: #{tpu_custom_call.1} parent=5 // pred_fallthru
        _
      %p644 = scmp.le.s32.totalorder 2, %s22
      // Predicated region
      $region65: #{tpu_custom_call.1} parent=5 // pred_check
        %p645 = pneg %p644
      $region66: #{tpu_custom_call.1} parent=5 // pred_check_branch
        %647 = sbr.rel (%p645) target = $region68
      $region67: #{tpu_custom_call.1} parent=5 // pred_region
        %s648 = ssub.s32 %s22, 2
        // Predicated region
        $region69: #{tpu_custom_call.1} parent=67 // pred_check
          %p649 = pneg %p169
        $region70: #{tpu_custom_call.1} parent=67 // pred_check_branch
          %651 = sbr.rel (%p649) target = $region72
        $region71: #{tpu_custom_call.1} parent=67 // pred_region
          %s652 = sand.u32 %s154, 1
          %s653 = scalar_lea.sflag [#allocation5], %s652
          %s654 = sand.u32 %s154, 1
          %s655 = smul.addr %s654, 8
          %s656 = scalar_lea.vmem [#allocation11], %s655
          %657 = dma.done %s653, 128
        $region72: #{tpu_custom_call.1} parent=67 // pred_fallthru
          _
      $region68: #{tpu_custom_call.1} parent=5 // pred_fallthru
        _
    $region6: #{tpu_custom_call.1} parent=1 // loop_footer
      %s26 = sadd.s32 1, %s22
    $region7: #{tpu_custom_call.1} parent=1 // loop_footer_branch
      %21 = sbr.rel target = $region3
    $region8: #{tpu_custom_call.1} parent=1 // loop_exit
      _
    %658 = vsyncpa [#allocation4], 1
    %s659 = scalar_lea.sflag [#allocation4], 1
    %660 = vsyncpa %s659, 1
    %661 = vsyncpa [#allocation7], 1
    %s662 = scalar_lea.sflag [#allocation7], 1
    %663 = vsyncpa %s662, 1
    %664 = vsyncpa [#allocation10], 1
    %s665 = scalar_lea.sflag [#allocation10], 1
    %666 = vsyncpa %s665, 1
    %667 = vsyncpa [#allocation5], 1
    %s668 = scalar_lea.sflag [#allocation5], 1
    %669 = vsyncpa %s668, 1

</llo_original>
